<compile_context>
chip_gen: v7x
topology: tpu7x:2x2x1
jax: 0.10.0
libtpu: 0.0.40
codegen_flags: <defaults>
</compile_context>

<pallas_src>
import jax
import jax.numpy as jnp
from jax.experimental import pallas as pl
from jax.experimental.pallas import tpu as pltpu


def ai_model_kernel(hs_ref, mask_ref, w_ref, b_ref, labels_ref,
                    logits_ref, loss_ref):
    """One batch tile: masked mean-pool -> Linear(H,1) -> per-example BCE.

    hs_ref     : [tb, S, H] bf16/f32  last_hidden_state tile
    mask_ref   : [tb, S]    f32       attention_mask tile
    w_ref      : [1, H]     f32       classifier weight (row vector)
    b_ref      : [1, 1]     f32       classifier bias (SMEM scalar)
    labels_ref : [tb, 1]    f32       binary labels tile
    logits_ref : [tb, 1]    f32       output logits tile
    loss_ref   : [tb, 1]    f32       output per-example BCE loss tile
    """
    # Upcast right after the (possibly bf16) DMA; all math stays f32 (v5e-safe).
    hs = hs_ref[...].astype(jnp.float32)            # [tb, S, H]
    mask = mask_ref[...]                            # [tb, S]
    w = w_ref[...].astype(jnp.float32)              # [1, H]

    # Reordered (algebraically identical to pool-then-linear):
    #   logits = (sum_s mask * (hs . w)) / clamp(sum_s mask, 1e-9) + bias
    # Avoids materializing the [tb,S,H] masked temporary and the pooled buffer.
    t = jnp.sum(hs * w[None, :, :], axis=-1)        # [tb, S]  (lane reduction)
    num = jnp.sum(t * mask, axis=1, keepdims=True)  # [tb, 1]
    sum_mask = jnp.maximum(jnp.sum(mask, axis=1, keepdims=True), 1e-9)

    # Dropout: identity (eval / inference semantics).

    logits = num / sum_mask + b_ref[0, 0]           # [tb, 1]
    logits_ref[...] = logits

    # BCEWithLogitsLoss per example, numerically stable form:
    #   max(x, 0) - x*y + log(1 + exp(-|x|))   (mean taken outside the kernel)
    y = labels_ref[...]                             # [tb, 1]
    x = logits
    loss_ref[...] = (jnp.maximum(x, 0.0) - x * y
                     + jnp.log(1.0 + jnp.exp(-jnp.abs(x))))


def ai_model_forward(last_hidden_state, attention_mask, weight, bias, labels,
                     block_b=8):
    """Masked-mean-pool + Linear(H,1) + BCEWithLogits, tiled over batch."""
    B, S, H = last_hidden_state.shape

    # Batch tile: full batch if it is small, otherwise a multiple-of-8 tile so
    # the sublane dim of every (tb, ...) block stays aligned.  Lower block_b
    # for very large S*H so 2x double-buffered hs tiles fit VMEM (v7x: 64 MiB).
    if B <= block_b:
        tb = B
    else:
        tb = max(8, (block_b // 8) * 8)
    grid = pl.cdiv(B, tb)
    b_pad = grid * tb

    hs = last_hidden_state                       # keep native dtype (bf16 OK)
    mask = attention_mask.astype(jnp.float32)
    labels2d = labels.astype(jnp.float32).reshape(B, 1)
    if b_pad != B:
        pad = b_pad - B
        hs = jnp.pad(hs, ((0, pad), (0, 0), (0, 0)))
        mask = jnp.pad(mask, ((0, pad), (0, 0)))      # zero mask -> clamp path
        labels2d = jnp.pad(labels2d, ((0, pad), (0, 0)))

    w = weight.reshape(1, H).astype(jnp.float32)
    b = bias.reshape(1, 1).astype(jnp.float32)

    grid_spec = pl.GridSpec(
        grid=(grid,),
        in_specs=[
            pl.BlockSpec((tb, S, H), lambda i: (i, 0, 0)),   # hs tile
            pl.BlockSpec((tb, S), lambda i: (i, 0)),         # mask tile
            pl.BlockSpec((1, H), lambda i: (0, 0)),          # weight (resident)
            pl.BlockSpec(memory_space=pltpu.MemorySpace.SMEM),  # bias scalar
            pl.BlockSpec((tb, 1), lambda i: (i, 0)),         # labels tile
        ],
        out_specs=[
            pl.BlockSpec((tb, 1), lambda i: (i, 0)),         # logits tile
            pl.BlockSpec((tb, 1), lambda i: (i, 0)),         # per-example loss
        ],
    )

    logits_pad, per_example_loss = pl.pallas_call(
        ai_model_kernel,
        out_shape=(
            jax.ShapeDtypeStruct((b_pad, 1), jnp.float32),
            jax.ShapeDtypeStruct((b_pad, 1), jnp.float32),
        ),
        grid_spec=grid_spec,
        compiler_params=pltpu.CompilerParams(
            dimension_semantics=("parallel",)),
    )(hs, mask, w, b, labels2d)

    logits = logits_pad[:B, 0]
    loss = jnp.mean(per_example_loss[:B, 0])   # mean reduction outside kernel
    return logits, loss


def reference_forward(last_hidden_state, attention_mask, weight, bias, labels):
    """Pure-JAX reference mirroring the PyTorch forward (eval mode)."""
    hs = last_hidden_state.astype(jnp.float32)
    mask = attention_mask.astype(jnp.float32)[:, :, None]
    sum_emb = jnp.sum(hs * mask, axis=1)
    sum_mask = jnp.clip(jnp.sum(mask, axis=1), 1e-9, None)
    pooled = sum_emb / sum_mask
    logits = (pooled @ weight.reshape(-1, 1).astype(jnp.float32)
              + bias.astype(jnp.float32))[:, 0]
    y = labels.astype(jnp.float32)
    x = logits
    loss = jnp.mean(jnp.maximum(x, 0.0) - x * y
                    + jnp.log(1.0 + jnp.exp(-jnp.abs(x))))
    return logits, loss


if __name__ == "__main__":
    # Small shapes consistent with the module: batch=2, seq=8, hidden=32.
    B, S, H, VOCAB = 2, 8, 32, 100
    key = jax.random.PRNGKey(0)
    k_ids, k_emb, k_w, k_b, k_lab = jax.random.split(key, 5)

    input_ids = jax.random.randint(k_ids, (B, S), 0, VOCAB)
    attention_mask = jnp.array(
        [[1, 1, 1, 1, 1, 1, 1, 1],
         [1, 1, 1, 1, 1, 0, 0, 0]], dtype=jnp.float32)
    labels = jax.random.bernoulli(k_lab, 0.5, (B,)).astype(jnp.float32)

    # TODO(synk): pretrained transformer backbone has no Pallas equivalent;
    # replaced by a deterministic embedding lookup producing last_hidden_state
    # (kept in bf16, like a real bf16 backbone, to exercise the bf16 DMA path).
    embedding_table = jax.random.normal(k_emb, (VOCAB, H), dtype=jnp.float32)
    last_hidden_state = embedding_table[input_ids].astype(jnp.bfloat16)

    # Classifier parameters: nn.Linear(H, 1).
    classifier_w = jax.random.normal(k_w, (H,), dtype=jnp.float32) * 0.02
    classifier_b = jax.random.normal(k_b, (1,), dtype=jnp.float32) * 0.02

    logits, loss = ai_model_forward(last_hidden_state, attention_mask,
                                    classifier_w, classifier_b, labels)
    jax.block_until_ready((logits, loss))

    ref_logits, ref_loss = reference_forward(last_hidden_state, attention_mask,
                                             classifier_w, classifier_b, labels)
    assert jnp.allclose(logits, ref_logits, atol=1e-4, rtol=1e-4), (logits, ref_logits)
    assert jnp.allclose(loss, ref_loss, atol=1e-4, rtol=1e-4), (loss, ref_loss)

    print("KERNEL_OK")
</pallas_src>

<mosaic_0001>
module attributes {stable_mosaic.version = 11 : i64} {
  func.func @ai_model_kernel(%arg0: i32, %arg1: memref<2x8x32xbf16, #tpu.memory_space<vmem>>, %arg2: memref<2x8xf32, #tpu.memory_space<vmem>>, %arg3: memref<1x32xf32, #tpu.memory_space<vmem>>, %arg4: memref<1x1xf32, #tpu.memory_space<smem>>, %arg5: memref<2x1xf32, #tpu.memory_space<vmem>>, %arg6: memref<2x1xf32, #tpu.memory_space<vmem>>, %arg7: memref<2x1xf32, #tpu.memory_space<vmem>>) attributes {dimension_semantics = [#tpu.dimension_semantics<parallel>], iteration_bounds = array<i64: 1>, scalar_prefetch = 0 : i64, scratch_operands = 0 : i64, tpu.core_type = #tpu.core_type<tc>, window_params = [{transform_indices = @transform_0, window_bounds = array<i64: 2, 8, 32>}, {transform_indices = @transform_1, window_bounds = array<i64: 2, 8>}, {pipeline_mode = #tpu.pipeline_mode<synchronous>, transform_indices = @transform_2, window_bounds = array<i64: 1, 32>}, {transform_indices = @transform_3, window_bounds = array<i64: 1, 1>}, {transform_indices = @transform_4, window_bounds = array<i64: 2, 1>}, {transform_indices = @transform_5, window_bounds = array<i64: 2, 1>}, {transform_indices = @transform_6, window_bounds = array<i64: 2, 1>}]} {
    %c0 = arith.constant 0 : index
    %c0_0 = arith.constant 0 : index
    %c0_1 = arith.constant 0 : index
    %0 = vector.load %arg1[%c0, %c0_0, %c0_1] : memref<2x8x32xbf16, #tpu.memory_space<vmem>>, vector<2x8x32xbf16>
    %1 = arith.extf %0 : vector<2x8x32xbf16> to vector<2x8x32xf32>
    %c0_2 = arith.constant 0 : index
    %c0_3 = arith.constant 0 : index
    %2 = vector.load %arg2[%c0_2, %c0_3] : memref<2x8xf32, #tpu.memory_space<vmem>>, vector<2x8xf32>
    %c0_4 = arith.constant 0 : index
    %c0_5 = arith.constant 0 : index
    %3 = vector.load %arg3[%c0_4, %c0_5] : memref<1x32xf32, #tpu.memory_space<vmem>>, vector<1x32xf32>
    %4 = vector.shape_cast %3 : vector<1x32xf32> to vector<1x1x32xf32>
    %5 = vector.broadcast %4 : vector<1x1x32xf32> to vector<2x8x32xf32>
    %6 = arith.mulf %1, %5 : vector<2x8x32xf32>
    %cst = arith.constant dense<0.000000e+00> : vector<2x8xf32>
    %7 = vector.multi_reduction <add>, %6, %cst [2] : vector<2x8x32xf32> to vector<2x8xf32>
    %8 = arith.mulf %7, %2 : vector<2x8xf32>
    %cst_6 = arith.constant dense<0.000000e+00> : vector<2xf32>
    %9 = vector.multi_reduction <add>, %8, %cst_6 [1] : vector<2x8xf32> to vector<2xf32>
    %10 = vector.shape_cast %9 : vector<2xf32> to vector<2x1xf32>
    %cst_7 = arith.constant dense<0.000000e+00> : vector<2xf32>
    %11 = vector.multi_reduction <add>, %2, %cst_7 [1] : vector<2x8xf32> to vector<2xf32>
    %12 = vector.shape_cast %11 : vector<2xf32> to vector<2x1xf32>
    %cst_8 = arith.constant 9.99999971E-10 : f32
    %13 = vector.broadcast %cst_8 : f32 to vector<2x1xf32>
    %14 = arith.maximumf %12, %13 : vector<2x1xf32>
    %15 = arith.divf %10, %14 : vector<2x1xf32>
    %c0_9 = arith.constant 0 : index
    %c0_10 = arith.constant 0 : index
    %16 = memref.load %arg4[%c0_9, %c0_10] : memref<1x1xf32, #tpu.memory_space<smem>>
    %17 = vector.broadcast %16 : f32 to vector<2x1xf32>
    %18 = arith.addf %15, %17 : vector<2x1xf32>
    %c0_11 = arith.constant 0 : index
    %c0_12 = arith.constant 0 : index
    %19 = vector.load %arg6[%c0_11, %c0_12] : memref<2x1xf32, #tpu.memory_space<vmem>>, vector<2x1xf32>
    tpu.vector_store %arg6[%c0_11, %c0_12], %18 {strides = array<i32>} : memref<2x1xf32, #tpu.memory_space<vmem>>, vector<2x1xf32>,
    %c0_13 = arith.constant 0 : index
    %c0_14 = arith.constant 0 : index
    %20 = vector.load %arg5[%c0_13, %c0_14] : memref<2x1xf32, #tpu.memory_space<vmem>>, vector<2x1xf32>
    %cst_15 = arith.constant 0.000000e+00 : f32
    %21 = vector.broadcast %cst_15 : f32 to vector<2x1xf32>
    %22 = arith.maximumf %18, %21 : vector<2x1xf32>
    %23 = arith.mulf %18, %20 : vector<2x1xf32>
    %24 = arith.subf %22, %23 : vector<2x1xf32>
    %25 = math.absf %18 : vector<2x1xf32>
    %cst_16 = arith.constant 0.000000e+00 : f32
    %26 = vector.broadcast %cst_16 : f32 to vector<2x1xf32>
    %27 = arith.subf %26, %25 : vector<2x1xf32>
    %28 = math.exp %27 : vector<2x1xf32>
    %cst_17 = arith.constant 1.000000e+00 : f32
    %29 = vector.broadcast %cst_17 : f32 to vector<2x1xf32>
    %30 = arith.addf %29, %28 : vector<2x1xf32>
    %31 = math.log %30 : vector<2x1xf32>
    %32 = arith.addf %24, %31 : vector<2x1xf32>
    %c0_18 = arith.constant 0 : index
    %c0_19 = arith.constant 0 : index
    %33 = vector.load %arg7[%c0_18, %c0_19] : memref<2x1xf32, #tpu.memory_space<vmem>>, vector<2x1xf32>
    tpu.vector_store %arg7[%c0_18, %c0_19], %32 {strides = array<i32>} : memref<2x1xf32, #tpu.memory_space<vmem>>, vector<2x1xf32>,
    return
  }
  func.func @transform_0(%arg0: i32) -> (i32, i32, i32) {
    %c0_i32 = arith.constant 0 : i32
    %c0_i32_0 = arith.constant 0 : i32
    %c0_i32_1 = arith.constant 0 : i32
    return %arg0, %c0_i32, %c0_i32_0 : i32, i32, i32
  }
  func.func @transform_1(%arg0: i32) -> (i32, i32) {
    %c0_i32 = arith.constant 0 : i32
    %c0_i32_0 = arith.constant 0 : i32
    return %arg0, %c0_i32 : i32, i32
  }
  func.func @transform_2(%arg0: i32) -> (i32, i32) {
    %c0_i32 = arith.constant 0 : i32
    %c0_i32_0 = arith.constant 0 : i32
    %c0_i32_1 = arith.constant 0 : i32
    return %c0_i32, %c0_i32_0 : i32, i32
  }
  func.func @transform_3(%arg0: i32) -> (i32, i32) {
    %c0_i32 = arith.constant 0 : i32
    %c0_i32_0 = arith.constant 0 : i32
    %c0_i32_1 = arith.constant 0 : i32
    return %c0_i32, %c0_i32_0 : i32, i32
  }
  func.func @transform_4(%arg0: i32) -> (i32, i32) {
    %c0_i32 = arith.constant 0 : i32
    %c0_i32_0 = arith.constant 0 : i32
    return %arg0, %c0_i32 : i32, i32
  }
  func.func @transform_5(%arg0: i32) -> (i32, i32) {
    %c0_i32 = arith.constant 0 : i32
    %c0_i32_0 = arith.constant 0 : i32
    return %arg0, %c0_i32 : i32, i32
  }
  func.func @transform_6(%arg0: i32) -> (i32, i32) {
    %c0_i32 = arith.constant 0 : i32
    %c0_i32_0 = arith.constant 0 : i32
    return %arg0, %c0_i32 : i32, i32
  }
}

</mosaic_0001>

<llo_original>
// kernel: tpu_custom_call.1
$region0: #{tpu_custom_call.1}
  #allocation0 [shape = 'u32[]', space=smem, size = 0x4, offset = 0x4, fixed_abs, tag = 'smem constant byte address 0x4 - core index']
  #allocation1 [shape = 'u32[144,128]{1,0:T(1,128)}', space=vmem, size = 0x12000, scoped, tag = 'internal scratch']
  #allocation2 [shape = 'f32[1,1]{1,0:T(1,128)S(6)}', space=smem, size = 0x200, scoped, tag = 'scoped memory for tpu_custom_call.1']
  %s0 = inlined_call_operand.hbm [shape: bf16[2,8,32], index: 0, kind: input, shape index: {}]
  %s1 = inlined_call_operand.vmem [shape: f32[2,8], index: 1, kind: input, shape index: {}]
  %s2 = inlined_call_operand.vmem [shape: f32[1,32], index: 2, kind: input, shape index: {}]
  %s3 = inlined_call_operand.<no memory space> [shape: f32[1,1], index: 3, kind: input, shape index: {}]
  %s4 = inlined_call_operand.vmem [shape: f32[2,1], index: 4, kind: input, shape index: {}]
  %s5 = inlined_call_operand.vmem [shape: f32[2,1], index: 5, kind: output, shape index: {0}]
  %s6 = inlined_call_operand.vmem [shape: f32[2,1], index: 6, kind: output, shape index: {1}]
  %7 = xla_tuple %s5, %s6
  %s8 = sld [smem:[#allocation0]]
  $region42: #{tpu_custom_call.1} parent=0
    _
  %s10 = ssub.s32 1, %s8
  %s11 = scalar_select 0, %s10, %s8
  %12 = sst [smem:[#allocation2]] %s3
  $region1: #{tpu_custom_call.1} parent=0
    #allocation3 [shape = 'u8[4096]{0}', space=vmem, size = 0x1000, scoped, tag = 'input window, operand 0, single buffered']
    #allocation4 [shape = 's32[1]{0}', space=sflag, size = 0x4, scoped, tag = 'scoped memory for tpu_custom_call.1']
    %13 = vsyncpa [#allocation4], 0
    // Predicated region
    $region2: #{tpu_custom_call.1} parent=1 // pred_check
      _
    $region3: #{tpu_custom_call.1} parent=1 // pred_check_branch
      %15 = sbr.rel (0) target = $region5
    $region4: #{tpu_custom_call.1} parent=1 // pred_region
      %s17 = ssub.s32 128, 128
      %18 = vsyncadd [#allocation4], %s17
      %s19 = sshll.u32 [#allocation3], 4
      %s20 = int_to_ptr.vmem [resolvable:$true] %s19
      %25 = dma.hbm_to_vmem [thread:$0]  %s0, 128, %s20, [#allocation4], 64, 64, 4
    $region5: #{tpu_custom_call.1} parent=1 // pred_fallthru
      _
    // Predicated region
    $region6: #{tpu_custom_call.1} parent=1 // pred_check
      _
    $region7: #{tpu_custom_call.1} parent=1 // pred_check_branch
      %27 = sbr.rel (0) target = $region9
    $region8: #{tpu_custom_call.1} parent=1 // pred_region
      _
    $region9: #{tpu_custom_call.1} parent=1 // pred_fallthru
      _
    // Predicated region
    $region10: #{tpu_custom_call.1} parent=1 // pred_check
      _
    $region11: #{tpu_custom_call.1} parent=1 // pred_check_branch
      %29 = sbr.rel (0) target = $region13
    $region12: #{tpu_custom_call.1} parent=1 // pred_region
      _
    $region13: #{tpu_custom_call.1} parent=1 // pred_fallthru
      _
    // Predicated region
    $region14: #{tpu_custom_call.1} parent=1 // pred_check
      _
    $region15: #{tpu_custom_call.1} parent=1 // pred_check_branch
      %31 = sbr.rel (0) target = $region17
    $region16: #{tpu_custom_call.1} parent=1 // pred_region
      _
    $region17: #{tpu_custom_call.1} parent=1 // pred_fallthru
      _
    // Predicated region
    $region18: #{tpu_custom_call.1} parent=1 // pred_check
      _
    $region19: #{tpu_custom_call.1} parent=1 // pred_check_branch
      %33 = sbr.rel (0) target = $region21
    $region20: #{tpu_custom_call.1} parent=1 // pred_region
      _
    $region21: #{tpu_custom_call.1} parent=1 // pred_fallthru
      _
    // Predicated region
    $region22: #{tpu_custom_call.1} parent=1 // pred_check
      _
    $region23: #{tpu_custom_call.1} parent=1 // pred_check_branch
      %35 = sbr.rel (0) target = $region25
    $region24: #{tpu_custom_call.1} parent=1 // pred_region
      %36 = dma.done [#allocation4], 128
    $region25: #{tpu_custom_call.1} parent=1 // pred_fallthru
      _
    %v37 = vld [vmem:[#allocation3] sm:$0xf]
    %v38 = vld [vmem:[#allocation3 + $0x4] sm:$0xf]
    %v39 = vunpack.c.l.bf16 %v37
    %v40 = vunpack.c.l.bf16 %v38
    %v41 = vld [vmem:[%s1] sm:$0x3]
    %v42 = vld [vmem:[%s2] sm:$0x1]
    %v44 = vlaneseq
    %v45 = vshrl.u32 %v44, 7
    %v46 = vsub.s32 0, %v45
    %v47 = vrot.slane %v42, %v46
    %v49 = vmul.f32 %v39, %v47
    %v50 = vmul.f32 %v40, %v47
    %vm51 = vcmask 261120
    %v52 = vsel %vm51, %v49, 0.0
    %53 = vadd.xlane.f32.xlu0 %v52
    %v54 = vpop.xlane.xlu0 %53
    %v55 = vsel %vm51, %v50, 0.0
    %56 = vadd.xlane.f32.xlu0 %v55
    %v57 = vpop.xlane.xlu0 %56
    %v59 = vlaneseq
    %v60 = vshrl.u32 %v59, 7
    %v61 = vsub.s32 0, %v60
    %v62 = vrot.slane %v41, %v61
    %64 = vbcast.lane.b32.xlu0 %v62, 256
    %v65 = vpop.permute.xlu0 %64
    %v66 = vlaneseq
    %v67 = vshrl.u32 %v66, 7
    %v68 = vsub.s32 1, %v67
    %v69 = vrot.slane %v41, %v68
    %71 = vbcast.lane.b32.xlu0 %v69, 256
    %v72 = vpop.permute.xlu0 %71
    %v75 = vmul.f32 %v54, %v65
    %v76 = vmul.f32 %v57, %v72
    %79 = vset.pattern.permute.xlu0 0
    %80 = vperm.xlu0 %79, %v75
    %v81 = vpop.permute.xlu0 %80
    %82 = vset.pattern.permute.xlu0 0
    %83 = vperm.xlu0 %82, %v76
    %v84 = vpop.permute.xlu0 %83
    %v85 = vlaneseq
    %v86 = vand.u32 %v85, 127
    %v87 = vlaneseq
    %v88 = vshrl.u32 %v87, 7
    %v89 = vsub.s32 %v86, %v88
    %v90 = vrot.slane %v81, %v89
    %v91 = vlaneseq
    %v92 = vshrl.u32 %v91, 7
    %v93 = vsub.s32 %v86, %v92
    %v94 = vrot.slane %v84, %v93
    %vm95 = vcmask 1041409
    %v96 = vsel %vm95, %v94, %v90
    %vm98 = vcmask 58368
    %v99 = vsel %vm98, %v96, 0.0
    %100 = vadd.xlane.f32.xlu0 %v99
    %v101 = vpop.xlane.xlu0 %100
    %v102 = vsel %vm98, %v41, 0.0
    %103 = vadd.xlane.f32.xlu0 %v102
    %v104 = vpop.xlane.xlu0 %103
    %v105 = vmax.f32 %v104, 1e-09
    %v106 = vrcp.pop %v105
    %v107 = vmul.f32 %v101, %v106
    %s108 = sld [smem:[#allocation2]]
    %v109 = vstv %s108
    %v110 = vadd.f32 %v107, %v109
    %vm111 = vcmask 1024
    %112 = vst.msk [vmem:[%s5] sm:$0x3] %vm111, %v110
    %v113 = vld [vmem:[%s4] sm:$0x3]
    %v114 = vmax.f32 %v110, 0.0
    %v115 = vmul.f32 %v110, %v113
    %v116 = vsub.f32 %v114, %v115
    %v117 = vand.u32 2147483647, %v110
    %v118 = vsub.f32 0.0, %v117
    %v119 = vmul.f32 %v118, 1.442695
    %v120 = vpow.pop %v119
    %v121 = vadd.f32 %v120, 1.0
    %v122 = vlog2.pop %v121
    %v123 = vmul.f32 %v122, 0.6931472
    %v124 = vadd.f32 %v116, %v123
    %125 = vst.msk [vmem:[%s6] sm:$0x3] %vm111, %v124
    // Predicated region
    $region26: #{tpu_custom_call.1} parent=1 // pred_check
      _
    $region27: #{tpu_custom_call.1} parent=1 // pred_check_branch
      %127 = sbr.rel (0) target = $region29
    $region28: #{tpu_custom_call.1} parent=1 // pred_region
      _
    $region29: #{tpu_custom_call.1} parent=1 // pred_fallthru
      _
    // Predicated region
    $region30: #{tpu_custom_call.1} parent=1 // pred_check
      _
    $region31: #{tpu_custom_call.1} parent=1 // pred_check_branch
      %129 = sbr.rel (0) target = $region33
    $region32: #{tpu_custom_call.1} parent=1 // pred_region
      _
    $region33: #{tpu_custom_call.1} parent=1 // pred_fallthru
      _
    // Predicated region
    $region34: #{tpu_custom_call.1} parent=1 // pred_check
      _
    $region35: #{tpu_custom_call.1} parent=1 // pred_check_branch
      %131 = sbr.rel (0) target = $region37
    $region36: #{tpu_custom_call.1} parent=1 // pred_region
      _
    $region37: #{tpu_custom_call.1} parent=1 // pred_fallthru
      _
    // Predicated region
    $region38: #{tpu_custom_call.1} parent=1 // pred_check
      _
    $region39: #{tpu_custom_call.1} parent=1 // pred_check_branch
      %133 = sbr.rel (0) target = $region41
    $region40: #{tpu_custom_call.1} parent=1 // pred_region
      _
    $region41: #{tpu_custom_call.1} parent=1 // pred_fallthru
      _
    %134 = vsyncpa [#allocation4], 1

</llo_original>
